<compile_context>
chip_gen: v5e
topology: v5e:2x2
jax: 0.10.0
libtpu: 0.0.40
codegen_flags: <defaults>
</compile_context>

<pallas_src>
import functools
import math

import jax
import jax.numpy as jnp
from jax import lax
from jax.experimental import pallas as pl
from jax.experimental.pallas import tpu as pltpu

LANES = 128


def _round_up(v, m):
    return ((v + m - 1) // m) * m


def _bce_kernel(pw_s_ref, x_ref, t_ref, *rest, block_rows, n_valid,
                first_pad_block, has_pad, stream_pw):
    """One (block_rows, 128) tile of elementwise BCE-with-logits, accumulated
    into the chunk-resident output block (vector accumulator)."""
    if stream_pw:
        pw_ref, o_ref = rest
    else:
        (o_ref,) = rest

    s = pl.program_id(1)

    @pl.when(s == 0)
    def _():
        o_ref[...] = jnp.zeros_like(o_ref)

    x = x_ref[...].astype(jnp.float32)
    t = t_ref[...].astype(jnp.float32)
    if stream_pw:
        pw = pw_ref[...].astype(jnp.float32)
    else:
        pw = pw_s_ref[0]                      # SMEM scalar, broadcast on VPU

    log_weight = 1.0 + (pw - 1.0) * t
    # numerically stable softplus(-x), identical to PyTorch's formulation
    stable = jnp.log1p(jnp.exp(-jnp.abs(x))) + jnp.maximum(-x, 0.0)
    loss = (1.0 - t) * x + log_weight * stable

    if has_pad:
        block_elems = block_rows * LANES
        gblock = pl.program_id(0) * pl.num_programs(1) + s

        # Fast path: blocks made entirely of real data (no mask needed).
        @pl.when(gblock < first_pad_block)
        def _():
            o_ref[...] += loss

        # Tail path: mask out zero-padded elements via an in-kernel iota.
        @pl.when(gblock >= first_pad_block)
        def _():
            row = lax.broadcasted_iota(jnp.int32, loss.shape, 0)
            lane = lax.broadcasted_iota(jnp.int32, loss.shape, 1)
            valid = n_valid - gblock * block_elems       # may be <= 0
            mask = (row * LANES + lane) < valid
            o_ref[...] += jnp.where(mask, loss, 0.0)
    else:
        o_ref[...] += loss


def weighted_bce_with_logits_loss(logits, targets, pos_weight=None,
                                  block_rows=1024, num_chunks=2):
    """Mean-reduced binary_cross_entropy_with_logits (PyTorch semantics)."""
    assert logits.shape == targets.shape
    n = int(math.prod(logits.shape))
    assert n > 0

    # --- pos_weight handling: None / scalar -> SMEM scalar; else stream it ---
    stream_pw = False
    pw_full = None
    if pos_weight is None:
        pw_scalar = jnp.ones((1,), jnp.float32)
    else:
        pw_arr = jnp.asarray(pos_weight, jnp.float32)
        if pw_arr.size == 1:
            pw_scalar = pw_arr.reshape((1,))
        else:
            stream_pw = True
            pw_scalar = jnp.ones((1,), jnp.float32)          # unused dummy
            pw_full = jnp.broadcast_to(pw_arr, logits.shape).reshape(-1)

    # --- tiling: lane-dense (rows, 128) slab, big row tiles, chunked grid ---
    rows = pl.cdiv(n, LANES)
    br = max(8, _round_up(min(block_rows, _round_up(rows, 8)), 8))
    blocks = pl.cdiv(rows, br)
    n_chunks = max(1, min(num_chunks, blocks))
    steps = pl.cdiv(blocks, n_chunks)
    rows_pad = n_chunks * steps * br
    n_pad = rows_pad * LANES
    pad = n_pad - n

    x = logits.reshape(-1)                    # keep native dtype; cast in-kernel
    t = targets.reshape(-1)
    if pad:
        x = jnp.pad(x, (0, pad))
        t = jnp.pad(t, (0, pad))
        if stream_pw:
            pw_full = jnp.pad(pw_full, (0, pad))
    x = x.reshape(rows_pad, LANES)
    t = t.reshape(rows_pad, LANES)
    if stream_pw:
        pw_full = pw_full.reshape(rows_pad, LANES)

    kernel = functools.partial(
        _bce_kernel,
        block_rows=br,
        n_valid=n,
        first_pad_block=n // (br * LANES),
        has_pad=pad > 0,
        stream_pw=stream_pw,
    )

    blk = pl.BlockSpec((br, LANES), lambda c, s, pw: (c * steps + s, 0))
    in_specs = [blk, blk] + ([blk] if stream_pw else [])
    operands = (pw_scalar, x, t) + ((pw_full,) if stream_pw else ())

    partials = pl.pallas_call(
        kernel,
        out_shape=jax.ShapeDtypeStruct((n_chunks * br, LANES), jnp.float32),
        grid_spec=pltpu.PrefetchScalarGridSpec(
            num_scalar_prefetch=1,
            grid=(n_chunks, steps),
            in_specs=in_specs,
            out_specs=pl.BlockSpec((br, LANES), lambda c, s, pw: (c, 0)),
        ),
        compiler_params=pltpu.CompilerParams(
            dimension_semantics=("parallel", "arbitrary"),
            vmem_limit_bytes=64 << 20,
        ),
    )(*operands)

    # Tiny final cross-lane reduce + mean outside the kernel.
    return jnp.sum(partials) * (1.0 / n)


def _reference(logits, targets, pos_weight=None):
    x = logits.astype(jnp.float32)
    t = targets.astype(jnp.float32)
    if pos_weight is None:
        pw = jnp.float32(1.0)
    else:
        pw = jnp.broadcast_to(jnp.asarray(pos_weight, jnp.float32), x.shape)
    log_weight = 1.0 + (pw - 1.0) * t
    stable = jnp.log1p(jnp.exp(-jnp.abs(x))) + jnp.maximum(-x, 0.0)
    return jnp.mean((1.0 - t) * x + log_weight * stable)


if __name__ == "__main__":
    key = jax.random.PRNGKey(0)
    k1, k2 = jax.random.split(key)

    # NCHW inputs, like the PyTorch usage (e.g. segmentation logits)
    shape = (2, 4, 16, 16)
    logits = jax.random.normal(k1, shape, dtype=jnp.float32) * 2.0
    targets = (jax.random.uniform(k2, shape) > 0.5).astype(jnp.float32)

    # pos_weight = None (module default) — SMEM scalar path
    loss_none = weighted_bce_with_logits_loss(logits, targets, pos_weight=None)
    # scalar pos_weight — SMEM scalar path
    loss_pw = weighted_bce_with_logits_loss(logits, targets, pos_weight=2.5)
    # per-channel pos_weight — streamed broadcast fallback path
    pw_c = jnp.array([0.5, 1.0, 2.0, 4.0], jnp.float32).reshape(4, 1, 1)
    loss_pwc = weighted_bce_with_logits_loss(logits, targets, pos_weight=pw_c)

    jax.block_until_ready((loss_none, loss_pw, loss_pwc))

    ref_none = _reference(logits, targets, None)
    ref_pw = _reference(logits, targets, 2.5)
    ref_pwc = _reference(logits, targets, pw_c)
    assert jnp.allclose(loss_none, ref_none, atol=1e-5, rtol=1e-5)
    assert jnp.allclose(loss_pw, ref_pw, atol=1e-5, rtol=1e-5)
    assert jnp.allclose(loss_pwc, ref_pwc, atol=1e-5, rtol=1e-5)

    print("KERNEL_OK")
</pallas_src>

<mosaic_0001>
module attributes {stable_mosaic.version = 11 : i64} {
  func.func @_bce_kernel(%arg0: i32, %arg1: i32, %arg2: memref<1xf32, #tpu.memory_space<smem>>, %arg3: memref<16x128xf32, #tpu.memory_space<vmem>>, %arg4: memref<16x128xf32, #tpu.memory_space<vmem>>, %arg5: memref<16x128xf32, #tpu.memory_space<vmem>>) attributes {dimension_semantics = [#tpu.dimension_semantics<parallel>, #tpu.dimension_semantics<arbitrary>], iteration_bounds = array<i64: 1, 1>, scalar_prefetch = 1 : i64, scratch_operands = 0 : i64, tpu.core_type = #tpu.core_type<tc>, window_params = [{transform_indices = @transform_0, window_bounds = array<i64: 16, 128>}, {transform_indices = @transform_1, window_bounds = array<i64: 16, 128>}, {transform_indices = @transform_2, window_bounds = array<i64: 16, 128>}]} {
    %c0_i32 = arith.constant 0 : i32
    %0 = arith.cmpi eq, %arg1, %c0_i32 : i32
    %1 = arith.extui %0 : i1 to i32
    %c0_i32_0 = arith.constant 0 : i32
    %2 = arith.cmpi ne, %1, %c0_i32_0 : i32
    scf.if %2 {
      %cst_14 = arith.constant 0.000000e+00 : f32
      %29 = vector.broadcast %cst_14 : f32 to vector<16x128xf32>
      %c0_15 = arith.constant 0 : index
      %c0_16 = arith.constant 0 : index
      %30 = vector.load %arg5[%c0_15, %c0_16] : memref<16x128xf32, #tpu.memory_space<vmem>>, vector<16x128xf32>
      tpu.vector_store %arg5[%c0_15, %c0_16], %29 {strides = array<i32>} : memref<16x128xf32, #tpu.memory_space<vmem>>, vector<16x128xf32>,
    } else {
    }
    %c0 = arith.constant 0 : index
    %c0_1 = arith.constant 0 : index
    %3 = vector.load %arg3[%c0, %c0_1] : memref<16x128xf32, #tpu.memory_space<vmem>>, vector<16x128xf32>
    %c0_2 = arith.constant 0 : index
    %c0_3 = arith.constant 0 : index
    %4 = vector.load %arg4[%c0_2, %c0_3] : memref<16x128xf32, #tpu.memory_space<vmem>>, vector<16x128xf32>
    %c0_4 = arith.constant 0 : index
    %5 = memref.load %arg2[%c0_4] : memref<1xf32, #tpu.memory_space<smem>>
    %cst = arith.constant 1.000000e+00 : f32
    %6 = arith.subf %5, %cst : f32
    %7 = vector.broadcast %6 : f32 to vector<16x128xf32>
    %8 = arith.mulf %7, %4 : vector<16x128xf32>
    %cst_5 = arith.constant 1.000000e+00 : f32
    %9 = vector.broadcast %cst_5 : f32 to vector<16x128xf32>
    %10 = arith.addf %9, %8 : vector<16x128xf32>
    %11 = math.absf %3 : vector<16x128xf32>
    %cst_6 = arith.constant 0.000000e+00 : f32
    %12 = vector.broadcast %cst_6 : f32 to vector<16x128xf32>
    %13 = arith.subf %12, %11 : vector<16x128xf32>
    %14 = math.exp %13 : vector<16x128xf32>
    %15 = math.log1p %14 : vector<16x128xf32>
    %cst_7 = arith.constant 0.000000e+00 : f32
    %16 = vector.broadcast %cst_7 : f32 to vector<16x128xf32>
    %17 = arith.subf %16, %3 : vector<16x128xf32>
    %cst_8 = arith.constant 0.000000e+00 : f32
    %18 = vector.broadcast %cst_8 : f32 to vector<16x128xf32>
    %19 = arith.maximumf %17, %18 : vector<16x128xf32>
    %20 = arith.addf %15, %19 : vector<16x128xf32>
    %cst_9 = arith.constant 1.000000e+00 : f32
    %21 = vector.broadcast %cst_9 : f32 to vector<16x128xf32>
    %22 = arith.subf %21, %4 : vector<16x128xf32>
    %23 = arith.mulf %22, %3 : vector<16x128xf32>
    %24 = arith.mulf %10, %20 : vector<16x128xf32>
    %25 = arith.addf %23, %24 : vector<16x128xf32>
    %c0_10 = arith.constant 0 : index
    %c0_11 = arith.constant 0 : index
    %26 = vector.load %arg5[%c0_10, %c0_11] : memref<16x128xf32, #tpu.memory_space<vmem>>, vector<16x128xf32>
    %27 = arith.addf %26, %25 : vector<16x128xf32>
    %c0_12 = arith.constant 0 : index
    %c0_13 = arith.constant 0 : index
    %28 = vector.load %arg5[%c0_12, %c0_13] : memref<16x128xf32, #tpu.memory_space<vmem>>, vector<16x128xf32>
    tpu.vector_store %arg5[%c0_12, %c0_13], %27 {strides = array<i32>} : memref<16x128xf32, #tpu.memory_space<vmem>>, vector<16x128xf32>,
    return
  }
  func.func @transform_0(%arg0: i32, %arg1: i32, %arg2: memref<1xf32, #tpu.memory_space<smem>>) -> (i32, i32) {
    %c1_i32 = arith.constant 1 : i32
    %0 = arith.muli %arg0, %c1_i32 : i32
    %1 = arith.addi %0, %arg1 : i32
    %c0_i32 = arith.constant 0 : i32
    %c0_i32_0 = arith.constant 0 : i32
    return %1, %c0_i32 : i32, i32
  }
  func.func @transform_1(%arg0: i32, %arg1: i32, %arg2: memref<1xf32, #tpu.memory_space<smem>>) -> (i32, i32) {
    %c1_i32 = arith.constant 1 : i32
    %0 = arith.muli %arg0, %c1_i32 : i32
    %1 = arith.addi %0, %arg1 : i32
    %c0_i32 = arith.constant 0 : i32
    %c0_i32_0 = arith.constant 0 : i32
    return %1, %c0_i32 : i32, i32
  }
  func.func @transform_2(%arg0: i32, %arg1: i32, %arg2: memref<1xf32, #tpu.memory_space<smem>>) -> (i32, i32) {
    %c0_i32 = arith.constant 0 : i32
    %c0_i32_0 = arith.constant 0 : i32
    return %arg0, %c0_i32 : i32, i32
  }
}

</mosaic_0001>

<llo_original>
// kernel: tpu_custom_call.1
$region0: #{tpu_custom_call.1}
  #allocation0 [shape = 'u32[]', space=smem, size = 0x4, offset = 0x4, fixed_abs, tag = 'smem constant byte address 0x4 - core index']
  #allocation1 [shape = 'u32[72,128]{1,0:T(1,128)}', space=vmem, size = 0x9000, scoped, tag = 'internal scratch']
  #allocation2 [shape = 's32[1]{0}', space=sflag, size = 0x4, scoped, tag = 'scoped memory for tpu_custom_call.1']
  #allocation3 [shape = 'f32[1]{0:T(128)S(6)}', space=smem, size = 0x200, scoped, tag = 'prefetched SMEM operand 0']
  %s0 = inlined_call_operand.<no memory space> [shape: f32[1], index: 0, kind: input, shape index: {}]
  %s1 = inlined_call_operand.hbm [shape: f32[16,128], index: 1, kind: input, shape index: {}]
  %s2 = inlined_call_operand.hbm [shape: f32[16,128], index: 2, kind: input, shape index: {}]
  %s3 = inlined_call_operand.hbm [shape: f32[16,128], index: 3, kind: output, shape index: {}]
  %s4 = sld [smem:[#allocation0]]
  $region30: #{tpu_custom_call.1} parent=0
    _
  %s6 = ssub.s32 1, %s4
  %s7 = scalar_select 0, %s6, %s4
  %8 = sst [smem:[#allocation3]] %s0
  $region1: #{tpu_custom_call.1} parent=0
    #allocation4 [shape = 'u8[8192]{0}', space=vmem, size = 0x2000, scoped, tag = 'input window, operand 1, single buffered']
    #allocation5 [shape = 's32[1]{0}', space=sflag, size = 0x4, scoped, tag = 'scoped memory for tpu_custom_call.1']
    #allocation6 [shape = 's32[1]{0}', space=sflag, size = 0x4, scoped, tag = 'scoped memory for tpu_custom_call.1']
    #allocation7 [shape = 'u8[8192]{0}', space=vmem, size = 0x2000, scoped, tag = 'input window, operand 2, single buffered']
    #allocation8 [shape = 's32[1]{0}', space=sflag, size = 0x4, scoped, tag = 'scoped memory for tpu_custom_call.1']
    #allocation9 [shape = 'u8[8192]{0}', space=vmem, size = 0x2000, scoped, tag = 'output window, operand 0, single buffered']
    %9 = vsyncpa [#allocation5], 0
    %10 = vsyncpa [#allocation8], 0
    %11 = vsyncpa [#allocation6], 0
    // Predicated region
    $region2: #{tpu_custom_call.1} parent=1 // pred_check
      _
    $region3: #{tpu_custom_call.1} parent=1 // pred_check_branch
      %13 = sbr.rel (0) target = $region5
    $region4: #{tpu_custom_call.1} parent=1 // pred_region
      %s14 = sadd.s32 0, 0
      %s15 = smul.u32 2, %s14
      %17 = vsyncadd [#allocation5], 0
      %s18 = smul.addr %s15, 8
      %s19 = scalar_lea.hbm %s1, %s18
      %s20 = sshll.u32 %s19, 4
      %s21 = int_to_ptr.hbm [resolvable:$true] %s20
      %s22 = sshll.u32 [#allocation4], 4
      %s23 = int_to_ptr.vmem [resolvable:$true] %s22
      %28 = dma.hbm_to_vmem [thread:$0]  %s21, 256, %s23, [#allocation5], 128, 128, 8
    $region5: #{tpu_custom_call.1} parent=1 // pred_fallthru
      _
    // Predicated region
    $region6: #{tpu_custom_call.1} parent=1 // pred_check
      _
    $region7: #{tpu_custom_call.1} parent=1 // pred_check_branch
      %30 = sbr.rel (0) target = $region9
    $region8: #{tpu_custom_call.1} parent=1 // pred_region
      %s31 = sadd.s32 0, 0
      %s32 = smul.u32 2, %s31
      %34 = vsyncadd [#allocation8], 0
      %s35 = smul.addr %s32, 8
      %s36 = scalar_lea.hbm %s2, %s35
      %s37 = sshll.u32 %s36, 4
      %s38 = int_to_ptr.hbm [resolvable:$true] %s37
      %s39 = sshll.u32 [#allocation7], 4
      %s40 = int_to_ptr.vmem [resolvable:$true] %s39
      %45 = dma.hbm_to_vmem [thread:$0]  %s38, 256, %s40, [#allocation8], 128, 128, 8
    $region9: #{tpu_custom_call.1} parent=1 // pred_fallthru
      _
    // Predicated region
    $region10: #{tpu_custom_call.1} parent=1 // pred_check
      _
    $region11: #{tpu_custom_call.1} parent=1 // pred_check_branch
      %47 = sbr.rel (0) target = $region13
    $region12: #{tpu_custom_call.1} parent=1 // pred_region
      %49 = dma.done [#allocation5], 256
    $region13: #{tpu_custom_call.1} parent=1 // pred_fallthru
      _
    // Predicated region
    $region14: #{tpu_custom_call.1} parent=1 // pred_check
      _
    $region15: #{tpu_custom_call.1} parent=1 // pred_check_branch
      %51 = sbr.rel (0) target = $region17
    $region16: #{tpu_custom_call.1} parent=1 // pred_region
      %53 = dma.done [#allocation8], 256
    $region17: #{tpu_custom_call.1} parent=1 // pred_fallthru
      _
    %s54 = sadd.s32 0, 0
    %s55 = smul.u32 2, %s54
    %s56 = sadd.s32 0, 0
    %s57 = smul.u32 2, %s56
    %p58 = scmp.eq.s32.totalorder 0, 0
    // Predicated region
    $region18: #{tpu_custom_call.1} parent=1 // pred_check
      %p59 = pneg %p58
    $region19: #{tpu_custom_call.1} parent=1 // pred_check_branch
      %61 = sbr.rel (%p59) target = $region21
    $region20: #{tpu_custom_call.1} parent=1 // pred_region
      %62 = vst [vmem:[#allocation9] sm:$0xff] 0.0
      %63 = vst [vmem:[#allocation9 + $0x8] sm:$0xff] 0.0
    $region21: #{tpu_custom_call.1} parent=1 // pred_fallthru
      _
    %v64 = vld [vmem:[#allocation4] sm:$0xff]
    %v65 = vld [vmem:[#allocation4 + $0x8] sm:$0xff]
    %v66 = vld [vmem:[#allocation7] sm:$0xff]
    %v67 = vld [vmem:[#allocation7 + $0x8] sm:$0xff]
    %s68 = sld [smem:[#allocation3]]
    %s69 = ssub.f32 %s68, 1.0
    %v70 = vstv %s69
    %v71 = vmul.f32 %v70, %v66
    %v72 = vmul.f32 %v70, %v67
    %v73 = vadd.f32 %v71, 1.0
    %v74 = vadd.f32 %v72, 1.0
    %v75 = vand.u32 2147483647, %v64
    %v76 = vand.u32 2147483647, %v65
    %v77 = vsub.f32 0.0, %v75
    %v78 = vsub.f32 0.0, %v76
    %v79 = vmul.f32 %v77, 1.442695
    %v80 = vpow.pop %v79
    %v81 = vmul.f32 %v78, 1.442695
    %v82 = vpow.pop %v81
    %v83 = vadd.f32 %v80, 1.0
    %v84 = vlog2.pop %v83
    %v85 = vmul.f32 %v84, 0.6931472
    %v86 = vmul.f32 -0.5, %v80
    %v87 = vadd.f32 %v86, 1.0
    %v88 = vmul.f32 %v87, %v80
    %v89 = vand.u32 2147483647, %v80
    %vm90 = vcmp.lt.f32.partialorder %v89, 0.0004427343
    %v91 = vsel %vm90, %v88, %v85
    %v92 = vadd.f32 %v82, 1.0
    %v93 = vlog2.pop %v92
    %v94 = vmul.f32 %v93, 0.6931472
    %v95 = vmul.f32 -0.5, %v82
    %v96 = vadd.f32 %v95, 1.0
    %v97 = vmul.f32 %v96, %v82
    %v98 = vand.u32 2147483647, %v82
    %vm99 = vcmp.lt.f32.partialorder %v98, 0.0004427343
    %v100 = vsel %vm99, %v97, %v94
    %v101 = vsub.f32 0.0, %v64
    %v102 = vsub.f32 0.0, %v65
    %v103 = vmax.f32 %v101, 0.0
    %v104 = vmax.f32 %v102, 0.0
    %v105 = vadd.f32 %v91, %v103
    %v106 = vadd.f32 %v100, %v104
    %v107 = vsub.f32 1.0, %v66
    %v108 = vsub.f32 1.0, %v67
    %v109 = vmul.f32 %v107, %v64
    %v110 = vmul.f32 %v108, %v65
    %v111 = vmul.f32 %v73, %v105
    %v112 = vmul.f32 %v74, %v106
    %v113 = vadd.f32 %v109, %v111
    %v114 = vadd.f32 %v110, %v112
    %v115 = vld [vmem:[#allocation9] sm:$0xff]
    %v116 = vld [vmem:[#allocation9 + $0x8] sm:$0xff]
    %v117 = vadd.f32 %v115, %v113
    %v118 = vadd.f32 %v116, %v114
    %119 = vst [vmem:[#allocation9] sm:$0xff] %v117
    %120 = vst [vmem:[#allocation9 + $0x8] sm:$0xff] %v118
    // Predicated region
    $region22: #{tpu_custom_call.1} parent=1 // pred_check
      _
    $region23: #{tpu_custom_call.1} parent=1 // pred_check_branch
      %122 = sbr.rel (0) target = $region25
    $region24: #{tpu_custom_call.1} parent=1 // pred_region
      %124 = vsyncadd [#allocation6], 0
      %s125 = sshll.u32 [#allocation9], 4
      %s126 = int_to_ptr.vmem [resolvable:$true] %s125
      %s127 = sshll.u32 %s3, 4
      %s128 = int_to_ptr.hbm [resolvable:$true] %s127
      %133 = dma.vmem_to_hbm [thread:$0]  %s126, 256, %s128, [#allocation6], 128, 128, 8
    $region25: #{tpu_custom_call.1} parent=1 // pred_fallthru
      _
    // Predicated region
    $region26: #{tpu_custom_call.1} parent=1 // pred_check
      _
    $region27: #{tpu_custom_call.1} parent=1 // pred_check_branch
      %135 = sbr.rel (0) target = $region29
    $region28: #{tpu_custom_call.1} parent=1 // pred_region
      %137 = dma.done [#allocation6], 256
    $region29: #{tpu_custom_call.1} parent=1 // pred_fallthru
      _
    %138 = vsyncpa [#allocation5], 1
    %139 = vsyncpa [#allocation8], 1
    %140 = vsyncpa [#allocation6], 1

</llo_original>
